<compile_context>
chip_gen: v7x
topology: tpu7x:2x2x1
jax: 0.10.0
libtpu: 0.0.40
codegen_flags: <defaults>
</compile_context>

<pallas_src>
import jax
import jax.numpy as jnp
import numpy as np
from jax.experimental import pallas as pl
from jax.experimental.pallas import tpu as pltpu

EPS = 1e-5
TIME_EMB_DIM = 256
N_TIMES = 1000


def sin_pos_emb_matrix(dim=TIME_EMB_DIM, n=N_TIMES):
    # SinPosEmbMatrix: row i = interleaved [sin, cos, sin, cos, ...] of i / 10000^(2j/dim)
    half = dim // 2
    t = jnp.arange(n, dtype=jnp.float32)[:, None]
    freqs = 10000.0 ** (2.0 * jnp.arange(half, dtype=jnp.float32) / dim)
    args = t / freqs[None, :]
    emb = jnp.stack([jnp.sin(args), jnp.cos(args)], axis=-1).reshape(n, dim)
    return emb                                                      # [1000, 256]


def make_params(key, cin, cout):
    ks = jax.random.split(key, 6)
    return dict(
        w1=jax.random.normal(ks[0], (cout, cin, 3), jnp.float32) * 0.2,
        b1=jax.random.normal(ks[1], (cout,), jnp.float32) * 0.1,
        w2=jax.random.normal(ks[2], (cout, cout, 3), jnp.float32) * 0.2,
        b2=jax.random.normal(ks[3], (cout,), jnp.float32) * 0.1,
        wl=jax.random.normal(ks[4], (cout, TIME_EMB_DIM), jnp.float32) * 0.05,
        bl=jax.random.normal(ks[5], (cout,), jnp.float32) * 0.1,
        g1=jnp.ones((cout,), jnp.float32), be1=jnp.zeros((cout,), jnp.float32),
        g2=jnp.ones((cout,), jnp.float32), be2=jnp.zeros((cout,), jnp.float32),
    )


def pack_down_params(params):
    """Parameter-only packing, hoisted out of the per-call forward (run once).

    Conv weights are packed per tap: W[o, k*C + i] = w[o, i, k], so each conv is one
    MXU matmul with contraction dim 3*C (tap k=0 -> input l-1, k=1 -> l, k=2 -> l+1).
    """
    cout, cin, _ = params['w1'].shape
    return dict(
        cin=cin, cout=cout,
        w1p=jnp.transpose(params['w1'], (0, 2, 1)).reshape(cout, 3 * cin).astype(jnp.bfloat16),
        w2p=jnp.transpose(params['w2'], (0, 2, 1)).reshape(cout, 3 * cout).astype(jnp.bfloat16),
        wl=params['wl'].astype(jnp.float32),                        # [Cout, 256]
        b1col=params['b1'][:, None],                                # [Cout, 1]
        b2bl=jnp.stack([params['b2'], params['bl']], axis=1),       # [Cout, 2]
        g1=params['g1'], be1=params['be1'],
        g2=params['g2'], be2=params['be2'],
    )


def down_forward_pallas(x, t, packed, time_table, *, lane_tile=None):
    B, Cin, L = x.shape
    assert L % 2 == 0, "MaxPool1d(2,2) path assumes even length"
    Lh = L // 2
    Cout = packed['w1p'].shape[0]
    assert Cin % 8 == 0 and Cout % 8 == 0, "pad channels to a multiple of 8"

    if lane_tile is None:
        for cand in (2048, 1024, 512, 256, 128):
            if Lh % cand == 0:
                lane_tile = cand
                break
    T = lane_tile
    assert T is not None and T % 128 == 0 and Lh % T == 0, \
        "pooled length must split into 128-multiple lane tiles"
    n_lt = Lh // T
    n_stat = float(B * Lh)                                          # BN sample count

    # ---------------- wrapper-side layout plumbing (zero FLOPs, XLA glue) ----------------
    # Even/odd de-interleave feeding the in-kernel MaxPool max.
    x_eo = jnp.stack([x[:, :, 0::2], x[:, :, 1::2]], axis=1)        # [B, 2, Cin, Lh]
    # Timestep embedding rows (data-dependent gather stays in the wrapper).
    trow = time_table[t].astype(jnp.float32)[:, None, :]            # [B, 1, 256]

    grid = (B, n_lt)
    cp_conv = pltpu.CompilerParams(
        dimension_semantics=("parallel", "arbitrary"),
        vmem_limit_bytes=32 * 1024 * 1024)
    cp_elem = pltpu.CompilerParams(
        dimension_semantics=("parallel", "parallel"),
        vmem_limit_bytes=32 * 1024 * 1024)

    # Index maps: current / clamped-left / clamped-right tiles for the k=3 halo columns.
    cur_x = lambda b, l: (b, 0, 0, l)
    left_x = lambda b, l: (b, 0, 0, jnp.maximum(l - 1, 0))
    right_x = lambda b, l: (b, 0, 0, jnp.minimum(l + 1, n_lt - 1))
    cur_y = lambda b, l: (b, 0, l)
    left_y = lambda b, l: (b, 0, jnp.maximum(l - 1, 0))
    right_y = lambda b, l: (b, 0, jnp.minimum(l + 1, n_lt - 1))
    bcast2 = lambda b, l: (0, 0)          # whole (small) operand every step
    per_b = lambda b, l: (b, 0, 0)        # per-batch small operand / accumulator

    x_spec = lambda imap: pl.BlockSpec((None, 2, Cin, T), imap)
    y_spec = lambda imap: pl.BlockSpec((None, Cout, T), imap)
    stat_spec = pl.BlockSpec((None, Cout, 2), per_b)

    # ----------------------------- shared in-kernel helpers ------------------------------
    def conv_k3(h, left_col, right_col, w):
        # h: [C, T] f32; left/right: [C, 1] f32 already zeroed at sequence edges.
        col = jax.lax.broadcasted_iota(jnp.int32, (1, T), 1)
        hl = jnp.where(col == 0, left_col, pltpu.roll(h, shift=1, axis=1))       # in[l-1]
        hr = jnp.where(col == T - 1, right_col, pltpu.roll(h, shift=T - 1, axis=1))  # in[l+1]
        # im2col slab built directly in bf16 (no f32 intermediate copy); one MXU matmul.
        x3 = jnp.concatenate([hl.astype(jnp.bfloat16),
                              h.astype(jnp.bfloat16),
                              hr.astype(jnp.bfloat16)], axis=0)                   # [3C, T]
        return jnp.dot(w, x3, preferred_element_type=jnp.float32)                 # [Cout, T]

    def accum_stats(st_ref, y):
        # Per-(batch, channel) running [sum, sumsq]; the lt axis is "arbitrary" so the
        # resident accumulator block is valid.  Lane reductions sit on the XLU; move them
        # to the MXU (ones-vector matmul) if the XLU becomes the binding slot.
        tile = jnp.concatenate([jnp.sum(y, axis=1, keepdims=True),
                                jnp.sum(y * y, axis=1, keepdims=True)], axis=1)   # [Cout, 2]

        @pl.when(pl.program_id(1) == 0)
        def _():
            st_ref[...] = jnp.zeros_like(st_ref)

        st_ref[...] += tile

    # ------------------------------ pass 1: maxpool + conv1 ------------------------------
    def pool_conv1_kernel(xc_ref, xl_ref, xr_ref, w1_ref, b1_ref, y1_ref, st1_ref):
        lt = pl.program_id(1)
        last = pl.num_programs(1) - 1
        h = jnp.maximum(xc_ref[0], xc_ref[1])                       # MaxPool1d(2,2) [Cin, T]
        lcol = jnp.maximum(xl_ref[0, :, T - 1:T], xl_ref[1, :, T - 1:T])
        rcol = jnp.maximum(xr_ref[0, :, 0:1], xr_ref[1, :, 0:1])
        lcol = jnp.where(lt > 0, lcol, 0.0)                         # zero pad at l = -1
        rcol = jnp.where(lt < last, rcol, 0.0)                      # zero pad at l = Lh
        y = conv_k3(h, lcol, rcol, w1_ref[...]) + b1_ref[...]       # [Cout, T] f32
        y1_ref[...] = y
        accum_stats(st1_ref, y)

    y1, st1 = pl.pallas_call(
        pool_conv1_kernel,
        grid=grid,
        in_specs=[x_spec(cur_x), x_spec(left_x), x_spec(right_x),
                  pl.BlockSpec((Cout, 3 * Cin), bcast2),
                  pl.BlockSpec((Cout, 1), bcast2)],
        out_specs=[y_spec(cur_y), stat_spec],
        out_shape=[jax.ShapeDtypeStruct((B, Cout, Lh), jnp.float32),
                   jax.ShapeDtypeStruct((B, Cout, 2), jnp.float32)],
        compiler_params=cp_conv,
        cost_estimate=pl.CostEstimate(
            flops=int(2 * B * Lh * 3 * Cin * Cout),
            transcendentals=0,
            bytes_accessed=int(3 * x_eo.size * 4 + B * Cout * Lh * 4)),
    )(x_eo, x_eo, x_eo, packed['w1p'], packed['b1col'])

    # Tiny [Cout]-vector math: fold BN stats into per-channel scale/shift (biased var).
    def fold_bn(st, gamma, beta):
        s = jnp.sum(st[:, :, 0], axis=0)
        ss = jnp.sum(st[:, :, 1], axis=0)
        m = s / n_stat
        v = ss / n_stat - m * m
        scale = gamma * jax.lax.rsqrt(v + EPS)
        shift = beta - m * scale
        return scale, shift

    scale1, shift1 = fold_bn(st1, packed['g1'], packed['be1'])
    pv2 = jnp.concatenate([scale1[:, None], shift1[:, None], packed['b2bl']], axis=1)  # [Cout,4]

    # ----------------- pass 2: bn1 + relu + time add ('channels_add') + conv2 -----------------
    def time_conv2_kernel(y1c_ref, y1l_ref, y1r_ref, trow_ref, wl_ref, w2_ref, pv_ref,
                          y2_ref, st2_ref):
        lt = pl.program_id(1)
        last = pl.num_programs(1) - 1
        pv = pv_ref[...]                                            # [Cout, 4]
        sc1, sh1, b2c, blc = pv[:, 0:1], pv[:, 1:2], pv[:, 2:3], pv[:, 3:4]
        # Linear(256 -> Cout) on this batch's embedding row (tiny; lane-reduced on VPU).
        tp = jnp.sum(wl_ref[...] * trow_ref[...], axis=1, keepdims=True) + blc   # [Cout, 1]

        def pre(v):   # bn1 (folded) -> relu -> + time; per-channel, no cross-column mixing
            return jnp.maximum(v * sc1 + sh1, 0.0) + tp

        h = pre(y1c_ref[...])                                       # [Cout, T]
        lcol = jnp.where(lt > 0, pre(y1l_ref[:, T - 1:T]), 0.0)
        rcol = jnp.where(lt < last, pre(y1r_ref[:, 0:1]), 0.0)
        y = conv_k3(h, lcol, rcol, w2_ref[...]) + b2c
        y2_ref[...] = y
        accum_stats(st2_ref, y)

    y2, st2 = pl.pallas_call(
        time_conv2_kernel,
        grid=grid,
        in_specs=[y_spec(cur_y), y_spec(left_y), y_spec(right_y),
                  pl.BlockSpec((None, 1, TIME_EMB_DIM), per_b),
                  pl.BlockSpec((Cout, TIME_EMB_DIM), bcast2),
                  pl.BlockSpec((Cout, 3 * Cout), bcast2),
                  pl.BlockSpec((Cout, 4), bcast2)],
        out_specs=[y_spec(cur_y), stat_spec],
        out_shape=[jax.ShapeDtypeStruct((B, Cout, Lh), jnp.float32),
                   jax.ShapeDtypeStruct((B, Cout, 2), jnp.float32)],
        compiler_params=cp_conv,
        cost_estimate=pl.CostEstimate(
            flops=int(2 * B * Lh * 3 * Cout * Cout),
            transcendentals=0,
            bytes_accessed=int(4 * B * Cout * Lh * 4)),
    )(y1, y1, y1, trow, packed['wl'], packed['w2p'], pv2)

    scale2, shift2 = fold_bn(st2, packed['g2'], packed['be2'])
    pv3 = jnp.stack([scale2, shift2], axis=1)                       # [Cout, 2]

    # ------------------------------- pass 3: bn2 + relu ----------------------------------
    def bn2_relu_kernel(y2_ref, pv_ref, o_ref):
        pv = pv_ref[...]
        o_ref[...] = jnp.maximum(y2_ref[...] * pv[:, 0:1] + pv[:, 1:2], 0.0)

    out = pl.pallas_call(
        bn2_relu_kernel,
        grid=grid,
        in_specs=[y_spec(cur_y), pl.BlockSpec((Cout, 2), bcast2)],
        out_specs=y_spec(cur_y),
        out_shape=jax.ShapeDtypeStruct((B, Cout, Lh), jnp.float32),
        compiler_params=cp_elem,
    )(y2, pv3)

    return out                                                      # [B, Cout, Lh] (NCL)


def down_forward_reference(x, t, p, time_table):
    # Pure-JAX f32 reference (matches PyTorch semantics) for correctness checking.
    B, Cin, L = x.shape
    h = x.reshape(B, Cin, L // 2, 2).max(axis=-1)                   # MaxPool1d(2, 2)

    def conv1d(h, w, b):
        out = jax.lax.conv_general_dilated(
            h, w, window_strides=(1,), padding=((1, 1),),
            dimension_numbers=('NCH', 'OIH', 'NCH'))
        return out + b[None, :, None]

    def bn(h, g, be):
        m = h.mean(axis=(0, 2), keepdims=True)
        v = ((h - m) ** 2).mean(axis=(0, 2), keepdims=True)
        return (h - m) / jnp.sqrt(v + EPS) * g[None, :, None] + be[None, :, None]

    h = jnp.maximum(bn(conv1d(h, p['w1'], p['b1']), p['g1'], p['be1']), 0.0)
    proj = time_table[t] @ p['wl'].T + p['bl']
    h = h + proj[:, :, None]
    h = jnp.maximum(bn(conv1d(h, p['w2'], p['b2']), p['g2'], p['be2']), 0.0)
    return h


if __name__ == "__main__":
    key = jax.random.PRNGKey(0)
    kx, kt, kp = jax.random.split(key, 3)

    # Small UNet-down-like shapes.  L = 512 -> pooled length 256 splits into two 128-lane
    # tiles, so the cross-tile conv halo and cross-tile BN-stat accumulation are exercised.
    B, Cin, Cout, L = 2, 8, 16, 512
    x = jax.random.normal(kx, (B, Cin, L), jnp.float32)
    t = jax.random.randint(kt, (B,), 0, N_TIMES)                    # diffusion timesteps

    params = make_params(kp, Cin, Cout)
    packed = pack_down_params(params)         # parameter packing hoisted out of the forward
    time_table = sin_pos_emb_matrix()

    out = down_forward_pallas(x, t, packed, time_table, lane_tile=128)
    out = jax.block_until_ready(out)

    ref = down_forward_reference(x, t, params, time_table)
    assert out.shape == (B, Cout, L // 2)
    # Tolerance accounts for bf16 MXU conv operands (f32 accumulation) vs. the f32 reference.
    np.testing.assert_allclose(np.asarray(out), np.asarray(ref), rtol=5e-2, atol=5e-2)

    print("KERNEL_OK")
</pallas_src>

<mosaic_0001>
module attributes {stable_mosaic.version = 11 : i64} {
  func.func @pool_conv1_kernel(%arg0: i32, %arg1: i32, %arg2: memref<1x2x8x128xf32, #tpu.memory_space<vmem>>, %arg3: memref<1x2x8x128xf32, #tpu.memory_space<vmem>>, %arg4: memref<1x2x8x128xf32, #tpu.memory_space<vmem>>, %arg5: memref<16x24xbf16, #tpu.memory_space<vmem>>, %arg6: memref<16x1xf32, #tpu.memory_space<vmem>>, %arg7: memref<1x16x128xf32, #tpu.memory_space<vmem>>, %arg8: memref<1x16x2xf32, #tpu.memory_space<vmem>>) attributes {dimension_semantics = [#tpu.dimension_semantics<parallel>, #tpu.dimension_semantics<arbitrary>], iteration_bounds = array<i64: 2, 2>, scalar_prefetch = 0 : i64, scratch_operands = 0 : i64, tpu.core_type = #tpu.core_type<tc>, window_params = [{transform_indices = @transform_0, window_bounds = array<i64: 1, 2, 8, 128>}, {transform_indices = @transform_1, window_bounds = array<i64: 1, 2, 8, 128>}, {transform_indices = @transform_2, window_bounds = array<i64: 1, 2, 8, 128>}, {pipeline_mode = #tpu.pipeline_mode<synchronous>, transform_indices = @transform_3, window_bounds = array<i64: 16, 24>}, {pipeline_mode = #tpu.pipeline_mode<synchronous>, transform_indices = @transform_4, window_bounds = array<i64: 16, 1>}, {transform_indices = @transform_5, window_bounds = array<i64: 1, 16, 128>}, {transform_indices = @transform_6, window_bounds = array<i64: 1, 16, 2>}]} {
    %c0 = arith.constant 0 : index
    %c0_0 = arith.constant 0 : index
    %c0_1 = arith.constant 0 : index
    %c0_2 = arith.constant 0 : index
    %0 = vector.load %arg2[%c0, %c0_0, %c0_1, %c0_2] : memref<1x2x8x128xf32, #tpu.memory_space<vmem>>, vector<1x1x8x128xf32>
    %1 = vector.shape_cast %0 : vector<1x1x8x128xf32> to vector<8x128xf32>
    %c0_3 = arith.constant 0 : index
    %c1 = arith.constant 1 : index
    %c0_4 = arith.constant 0 : index
    %c0_5 = arith.constant 0 : index
    %2 = vector.load %arg2[%c0_3, %c1, %c0_4, %c0_5] : memref<1x2x8x128xf32, #tpu.memory_space<vmem>>, vector<1x1x8x128xf32>
    %3 = vector.shape_cast %2 : vector<1x1x8x128xf32> to vector<8x128xf32>
    %4 = arith.maximumf %1, %3 : vector<8x128xf32>
    %c0_6 = arith.constant 0 : index
    %c0_7 = arith.constant 0 : index
    %c0_8 = arith.constant 0 : index
    %c127 = arith.constant 127 : index
    %5 = vector.load %arg3[%c0_6, %c0_7, %c0_8, %c127] : memref<1x2x8x128xf32, #tpu.memory_space<vmem>>, vector<1x1x8x1xf32>
    %6 = vector.shape_cast %5 : vector<1x1x8x1xf32> to vector<8x1xf32>
    %c0_9 = arith.constant 0 : index
    %c1_10 = arith.constant 1 : index
    %c0_11 = arith.constant 0 : index
    %c127_12 = arith.constant 127 : index
    %7 = vector.load %arg3[%c0_9, %c1_10, %c0_11, %c127_12] : memref<1x2x8x128xf32, #tpu.memory_space<vmem>>, vector<1x1x8x1xf32>
    %8 = vector.shape_cast %7 : vector<1x1x8x1xf32> to vector<8x1xf32>
    %9 = arith.maximumf %6, %8 : vector<8x1xf32>
    %c0_13 = arith.constant 0 : index
    %c0_14 = arith.constant 0 : index
    %c0_15 = arith.constant 0 : index
    %c0_16 = arith.constant 0 : index
    %10 = vector.load %arg4[%c0_13, %c0_14, %c0_15, %c0_16] : memref<1x2x8x128xf32, #tpu.memory_space<vmem>>, vector<1x1x8x1xf32>
    %11 = vector.shape_cast %10 : vector<1x1x8x1xf32> to vector<8x1xf32>
    %c0_17 = arith.constant 0 : index
    %c1_18 = arith.constant 1 : index
    %c0_19 = arith.constant 0 : index
    %c0_20 = arith.constant 0 : index
    %12 = vector.load %arg4[%c0_17, %c1_18, %c0_19, %c0_20] : memref<1x2x8x128xf32, #tpu.memory_space<vmem>>, vector<1x1x8x1xf32>
    %13 = vector.shape_cast %12 : vector<1x1x8x1xf32> to vector<8x1xf32>
    %14 = arith.maximumf %11, %13 : vector<8x1xf32>
    %c0_i32 = arith.constant 0 : i32
    %15 = arith.cmpi sgt, %arg1, %c0_i32 : i32
    %cst = arith.constant 0.000000e+00 : f32
    %16 = vector.broadcast %cst : f32 to vector<8x1xf32>
    %17 = arith.select %15, %9, %16 : vector<8x1xf32>
    %c1_i32 = arith.constant 1 : i32
    %18 = arith.cmpi slt, %arg1, %c1_i32 : i32
    %cst_21 = arith.constant 0.000000e+00 : f32
    %19 = vector.broadcast %cst_21 : f32 to vector<8x1xf32>
    %20 = arith.select %18, %14, %19 : vector<8x1xf32>
    %c0_22 = arith.constant 0 : index
    %c0_23 = arith.constant 0 : index
    %21 = vector.load %arg5[%c0_22, %c0_23] : memref<16x24xbf16, #tpu.memory_space<vmem>>, vector<16x24xbf16>
    %22 = tpu.iota {dimensions = array<i32: 1>} : vector<1x128xi32>
    %c0_i32_24 = arith.constant 0 : i32
    %23 = vector.broadcast %c0_i32_24 : i32 to vector<1x128xi32>
    %24 = arith.cmpi eq, %22, %23 : vector<1x128xi32>
    %c1_i32_25 = arith.constant 1 : i32
    %25 = tpu.dynamic_rotate %4 by %c1_i32_25 dim 1 : vector<8x128xf32>, i32 -> vector<8x128xf32>
    %26 = vector.shape_cast %24 : vector<1x128xi1> to vector<1x128xi1>
    %27 = vector.broadcast %26 : vector<1x128xi1> to vector<8x128xi1>
    %28 = vector.shape_cast %17 : vector<8x1xf32> to vector<8x1xf32>
    %29 = vector.broadcast %28 : vector<8x1xf32> to vector<8x128xf32>
    %30 = arith.select %27, %29, %25 : vector<8x128xi1>, vector<8x128xf32>
    %c127_i32 = arith.constant 127 : i32
    %31 = vector.broadcast %c127_i32 : i32 to vector<1x128xi32>
    %32 = arith.cmpi eq, %22, %31 : vector<1x128xi32>
    %c127_i32_26 = arith.constant 127 : i32
    %33 = tpu.dynamic_rotate %4 by %c127_i32_26 dim 1 : vector<8x128xf32>, i32 -> vector<8x128xf32>
    %34 = vector.shape_cast %32 : vector<1x128xi1> to vector<1x128xi1>
    %35 = vector.broadcast %34 : vector<1x128xi1> to vector<8x128xi1>
    %36 = vector.shape_cast %20 : vector<8x1xf32> to vector<8x1xf32>
    %37 = vector.broadcast %36 : vector<8x1xf32> to vector<8x128xf32>
    %38 = arith.select %35, %37, %33 : vector<8x128xi1>, vector<8x128xf32>
    %39 = arith.truncf %30 : vector<8x128xf32> to vector<8x128xbf16>
    %40 = arith.truncf %4 : vector<8x128xf32> to vector<8x128xbf16>
    %41 = arith.truncf %38 : vector<8x128xf32> to vector<8x128xbf16>
    %42 = tpu.concatenate %39, %40, %41 in 0 : vector<8x128xbf16>, vector<8x128xbf16>, vector<8x128xbf16> -> vector<24x128xbf16>
    %cst_27 = arith.constant dense<0.000000e+00> : vector<16x128xf32>
    %43 = tpu.matmul %21, %42, %cst_27 {dimension_numbers = #tpu.dot_dimension_numbers<[1], [0], [0], [1], [0, 0, 1, 1], [], []>} : vector<16x24xbf16>, vector<24x128xbf16>, vector<16x128xf32> -> vector<16x128xf32>
    %c0_28 = arith.constant 0 : index
    %c0_29 = arith.constant 0 : index
    %44 = vector.load %arg6[%c0_28, %c0_29] : memref<16x1xf32, #tpu.memory_space<vmem>>, vector<16x1xf32>
    %45 = vector.broadcast %44 : vector<16x1xf32> to vector<16x128xf32>
    %46 = arith.addf %43, %45 : vector<16x128xf32>
    %c0_30 = arith.constant 0 : index
    %c0_31 = arith.constant 0 : index
    %c0_32 = arith.constant 0 : index
    %47 = vector.load %arg7[%c0_30, %c0_31, %c0_32] : memref<1x16x128xf32, #tpu.memory_space<vmem>>, vector<1x16x128xf32>
    %48 = vector.shape_cast %47 : vector<1x16x128xf32> to vector<16x128xf32>
    %49 = vector.shape_cast %46 : vector<16x128xf32> to vector<1x16x128xf32>
    tpu.vector_store %arg7[%c0_30, %c0_31, %c0_32], %49 {strides = array<i32>} : memref<1x16x128xf32, #tpu.memory_space<vmem>>, vector<1x16x128xf32>,
    %cst_33 = arith.constant dense<0.000000e+00> : vector<16xf32>
    %50 = vector.multi_reduction <add>, %46, %cst_33 [1] : vector<16x128xf32> to vector<16xf32>
    %51 = vector.shape_cast %50 : vector<16xf32> to vector<16x1xf32>
    %52 = arith.mulf %46, %46 : vector<16x128xf32>
    %cst_34 = arith.constant dense<0.000000e+00> : vector<16xf32>
    %53 = vector.multi_reduction <add>, %52, %cst_34 [1] : vector<16x128xf32> to vector<16xf32>
    %54 = vector.shape_cast %53 : vector<16xf32> to vector<16x1xf32>
    %55 = tpu.concatenate %51, %54 in 1 : vector<16x1xf32>, vector<16x1xf32> -> vector<16x2xf32>
    %c0_i32_35 = arith.constant 0 : i32
    %56 = arith.cmpi eq, %arg1, %c0_i32_35 : i32
    %57 = arith.extui %56 : i1 to i32
    %c0_i32_36 = arith.constant 0 : i32
    %58 = arith.cmpi ne, %57, %c0_i32_36 : i32
    scf.if %58 {
      %cst_43 = arith.constant 0.000000e+00 : f32
      %65 = vector.broadcast %cst_43 : f32 to vector<16x2xf32>
      %c0_44 = arith.constant 0 : index
      %c0_45 = arith.constant 0 : index
      %c0_46 = arith.constant 0 : index
      %66 = vector.load %arg8[%c0_44, %c0_45, %c0_46] : memref<1x16x2xf32, #tpu.memory_space<vmem>>, vector<1x16x2xf32>
      %67 = vector.shape_cast %66 : vector<1x16x2xf32> to vector<16x2xf32>
      %68 = vector.shape_cast %65 : vector<16x2xf32> to vector<1x16x2xf32>
      tpu.vector_store %arg8[%c0_44, %c0_45, %c0_46], %68 {strides = array<i32>} : memref<1x16x2xf32, #tpu.memory_space<vmem>>, vector<1x16x2xf32>,
    } else {
    }
    %c0_37 = arith.constant 0 : index
    %c0_38 = arith.constant 0 : index
    %c0_39 = arith.constant 0 : index
    %59 = vector.load %arg8[%c0_37, %c0_38, %c0_39] : memref<1x16x2xf32, #tpu.memory_space<vmem>>, vector<1x16x2xf32>
    %60 = vector.shape_cast %59 : vector<1x16x2xf32> to vector<16x2xf32>
    %61 = arith.addf %60, %55 : vector<16x2xf32>
    %c0_40 = arith.constant 0 : index
    %c0_41 = arith.constant 0 : index
    %c0_42 = arith.constant 0 : index
    %62 = vector.load %arg8[%c0_40, %c0_41, %c0_42] : memref<1x16x2xf32, #tpu.memory_space<vmem>>, vector<1x16x2xf32>
    %63 = vector.shape_cast %62 : vector<1x16x2xf32> to vector<16x2xf32>
    %64 = vector.shape_cast %61 : vector<16x2xf32> to vector<1x16x2xf32>
    tpu.vector_store %arg8[%c0_40, %c0_41, %c0_42], %64 {strides = array<i32>} : memref<1x16x2xf32, #tpu.memory_space<vmem>>, vector<1x16x2xf32>,
    return
  }
  func.func @transform_0(%arg0: i32, %arg1: i32) -> (i32, i32, i32, i32) {
    %c0_i32 = arith.constant 0 : i32
    %c0_i32_0 = arith.constant 0 : i32
    %c0_i32_1 = arith.constant 0 : i32
    return %arg0, %c0_i32, %c0_i32_0, %arg1 : i32, i32, i32, i32
  }
  func.func @transform_1(%arg0: i32, %arg1: i32) -> (i32, i32, i32, i32) {
    %c1_i32 = arith.constant 1 : i32
    %0 = arith.subi %arg1, %c1_i32 : i32
    %c0_i32 = arith.constant 0 : i32
    %1 = arith.maxsi %0, %c0_i32 : i32
    %c0_i32_0 = arith.constant 0 : i32
    %c0_i32_1 = arith.constant 0 : i32
    %c0_i32_2 = arith.constant 0 : i32
    return %arg0, %c0_i32_0, %c0_i32_1, %1 : i32, i32, i32, i32
  }
  func.func @transform_2(%arg0: i32, %arg1: i32) -> (i32, i32, i32, i32) {
    %c1_i32 = arith.constant 1 : i32
    %0 = arith.addi %arg1, %c1_i32 : i32
    %c1_i32_0 = arith.constant 1 : i32
    %1 = arith.minsi %0, %c1_i32_0 : i32
    %c0_i32 = arith.constant 0 : i32
    %c0_i32_1 = arith.constant 0 : i32
    %c0_i32_2 = arith.constant 0 : i32
    return %arg0, %c0_i32, %c0_i32_1, %1 : i32, i32, i32, i32
  }
  func.func @transform_3(%arg0: i32, %arg1: i32) -> (i32, i32) {
    %c0_i32 = arith.constant 0 : i32
    %c0_i32_0 = arith.constant 0 : i32
    %c0_i32_1 = arith.constant 0 : i32
    return %c0_i32, %c0_i32_0 : i32, i32
  }
  func.func @transform_4(%arg0: i32, %arg1: i32) -> (i32, i32) {
    %c0_i32 = arith.constant 0 : i32
    %c0_i32_0 = arith.constant 0 : i32
    %c0_i32_1 = arith.constant 0 : i32
    return %c0_i32, %c0_i32_0 : i32, i32
  }
  func.func @transform_5(%arg0: i32, %arg1: i32) -> (i32, i32, i32) {
    %c0_i32 = arith.constant 0 : i32
    %c0_i32_0 = arith.constant 0 : i32
    return %arg0, %c0_i32, %arg1 : i32, i32, i32
  }
  func.func @transform_6(%arg0: i32, %arg1: i32) -> (i32, i32, i32) {
    %c0_i32 = arith.constant 0 : i32
    %c0_i32_0 = arith.constant 0 : i32
    %c0_i32_1 = arith.constant 0 : i32
    return %arg0, %c0_i32, %c0_i32_0 : i32, i32, i32
  }
}

</mosaic_0001>

<llo_original>
// kernel: tpu_custom_call.1
$region0: #{tpu_custom_call.1}
  #allocation0 [shape = 'u32[]', space=smem, size = 0x4, offset = 0x4, fixed_abs, tag = 'smem constant byte address 0x4 - core index']
  #allocation1 [shape = 'u32[144,128]{1,0:T(1,128)}', space=vmem, size = 0x12000, scoped, tag = 'internal scratch']
  %s0 = inlined_call_operand.hbm [shape: f32[2,2,8,256], index: 0, kind: input, shape index: {}]
  %s1 = inlined_call_operand.hbm [shape: f32[2,2,8,256], index: 1, kind: input, shape index: {}]
  %s2 = inlined_call_operand.hbm [shape: f32[2,2,8,256], index: 2, kind: input, shape index: {}]
  %s3 = inlined_call_operand.vmem [shape: bf16[16,24], index: 3, kind: input, shape index: {}]
  %s4 = inlined_call_operand.vmem [shape: f32[16,1], index: 4, kind: input, shape index: {}]
  %s5 = inlined_call_operand.hbm [shape: f32[2,16,256], index: 5, kind: output, shape index: {0}]
  %s6 = inlined_call_operand.vmem [shape: f32[2,16,2], index: 6, kind: output, shape index: {1}]
  %7 = xla_tuple %s5, %s6
  %s8 = sld [smem:[#allocation0]]
  $region77: #{tpu_custom_call.1} parent=0
    _
  %s10 = ssub.s32 1, %s8
  %s11 = scalar_select 0, %s10, %s8
  $region1: #{tpu_custom_call.1} parent=0
    #allocation2 [shape = 'u8[16384]{0}', space=vmem, size = 0x4000, scoped, tag = 'input window, operand 0']
    #allocation3 [shape = 's32[2]{0}', space=sflag, size = 0x8, scoped, tag = 'scoped memory for tpu_custom_call.1']
    #allocation4 [shape = 's32[2]{0}', space=sflag, size = 0x8, scoped, tag = 'scoped memory for tpu_custom_call.1']
    #allocation5 [shape = 'u8[16384]{0}', space=vmem, size = 0x4000, scoped, tag = 'input window, operand 1']
    #allocation6 [shape = 's32[2]{0}', space=sflag, size = 0x8, scoped, tag = 'scoped memory for tpu_custom_call.1']
    #allocation7 [shape = 'u8[16384]{0}', space=vmem, size = 0x4000, scoped, tag = 'input window, operand 2']
    #allocation8 [shape = 'u8[16384]{0}', space=vmem, size = 0x4000, scoped, tag = 'output window, operand 0']
    %12 = vsyncpa [#allocation3], 0
    %s13 = scalar_lea.sflag [#allocation3], 1
    %14 = vsyncpa %s13, 0
    %15 = vsyncpa [#allocation6], 0
    %s16 = scalar_lea.sflag [#allocation6], 1
    %17 = vsyncpa %s16, 0
    %18 = vsyncpa [#allocation4], 0
    %s19 = scalar_lea.sflag [#allocation4], 1
    %20 = vsyncpa %s19, 0
    loop: start=0, step=1, limit=6
    $region2: #{tpu_custom_call.1} parent=1 // loop_pre_header
      _
    $region3: #{tpu_custom_call.1} parent=1 // loop_header
      %s22 = sphi 0, %s26
      %p23 = scmp.ge.s32.totalorder %s22, 6
      %s29 = sphi 0, %s41
      %s30 = sphi 0, %s37
      %s31 = sphi 0, %s29
      %s32 = sphi 0, %s30
      %s33 = sphi 0, %s31
      %s34 = sphi 0, %s32
      %s46 = sphi 0, %s48
      %s49 = sphi 0, %s46
      %s50 = sphi 0, %s49
      %s66 = sphi 0, %s50
      %s80 = sphi 0, %s82
      %s83 = sphi 0, %s80
      %s84 = sphi 0, %s83
      %s100 = sphi 0, %s84
      %s114 = sphi 0, %s116
      %s117 = sphi 0, %s114
      %s118 = sphi 0, %s117
      %s134 = sphi 0, %s118
      %s138 = sphi 0, %s138
      %s140 = sphi 0, %s138
      %s141 = sphi 0, %s140
      %s155 = sphi 0, %s141
      %s159 = sphi 0, %s159
      %s161 = sphi 0, %s159
      %s162 = sphi 0, %s161
      %s176 = sphi 0, %s162
      %s184 = sphi 0, %s186
      %s187 = sphi 0, %s184
      %s188 = sphi 0, %s187
      %s204 = sphi 0, %s188
      %s210 = sphi 0, %s212
      %s213 = sphi 0, %s210
      %s214 = sphi 0, %s213
      %s230 = sphi 0, %s214
    $region4: #{tpu_custom_call.1} parent=1 // loop_header_branch
      %25 = sbr.rel (%p23) target = $region8
    $region5: #{tpu_custom_call.1} parent=1 // loop_body
      %s27 = ssub.s32 %s22, 1
      %s28 = ssub.s32 %s22, 2
      %s35 = sadd.s32 1, %s30
      %p36 = scmp.ge.s32.totalorder %s35, 2
      %s37 = scalar_select %p36, 0, %s35
      %s38 = sadd.s32 1, %s29
      %s39 = scalar_select %p36, %s38, %s29
      %p40 = scmp.ge.s32.totalorder %s39, 2
      %s41 = scalar_select %p40, 0, %s39
      %s42 = ssub.s32 %s29, %s41
      %s43 = ssub.s32 %s30, %s37
      %s44 = sor.u32 %s42, %s43
      %p45 = scmp.eq.s32.totalorder %s44, 0
      %s47 = sadd.s32 %s46, 1
      %s48 = scalar_select %p45, %s46, %s47
      %p51 = pneg %p45
      %p52 = scmp.eq.s32.totalorder %s22, 3
      %p53 = por %p51, %p52
      %p54 = scmp.ne.s32.totalorder %s46, %s49
      %p55 = scmp.eq.s32.totalorder %s22, 0
      %p56 = por %p54, %p55
      %p57 = scmp.ne.s32.totalorder %s46, %s49
      %p58 = scmp.eq.s32.totalorder %s27, 3
      %p59 = por %p57, %p58
      %p60 = scmp.ne.s32.totalorder %s49, %s50
      %p61 = scmp.eq.s32.totalorder %s27, 0
      %p62 = por %p60, %p61
      %p63 = scmp.ne.s32.totalorder %s49, %s50
      %p64 = scmp.eq.s32.totalorder %s28, 3
      %p65 = por %p63, %p64
      %p67 = scmp.ne.s32.totalorder %s50, %s66
      %p68 = scmp.eq.s32.totalorder %s28, 0
      %p69 = por %p67, %p68
      %s70 = ssub.s32 %s30, 1
      %p71 = scmp.gt.s32.totalorder %s70, 0
      %s72 = scalar_select %p71, %s70, 0
      %s73 = ssub.s32 %s37, 1
      %p74 = scmp.gt.s32.totalorder %s73, 0
      %s75 = scalar_select %p74, %s73, 0
      %s76 = ssub.s32 %s29, %s41
      %s77 = ssub.s32 %s72, %s75
      %s78 = sor.u32 %s76, %s77
      %p79 = scmp.eq.s32.totalorder %s78, 0
      %s81 = sadd.s32 %s80, 1
      %s82 = scalar_select %p79, %s80, %s81
      %p85 = pneg %p79
      %p86 = scmp.eq.s32.totalorder %s22, 3
      %p87 = por %p85, %p86
      %p88 = scmp.ne.s32.totalorder %s80, %s83
      %p89 = scmp.eq.s32.totalorder %s22, 0
      %p90 = por %p88, %p89
      %p91 = scmp.ne.s32.totalorder %s80, %s83
      %p92 = scmp.eq.s32.totalorder %s27, 3
      %p93 = por %p91, %p92
      %p94 = scmp.ne.s32.totalorder %s83, %s84
      %p95 = scmp.eq.s32.totalorder %s27, 0
      %p96 = por %p94, %p95
      %p97 = scmp.ne.s32.totalorder %s83, %s84
      %p98 = scmp.eq.s32.totalorder %s28, 3
      %p99 = por %p97, %p98
      %p101 = scmp.ne.s32.totalorder %s84, %s100
      %p102 = scmp.eq.s32.totalorder %s28, 0
      %p103 = por %p101, %p102
      %s104 = sadd.s32 %s30, 1
      %p105 = scmp.lt.s32.totalorder %s104, 1
      %s106 = scalar_select %p105, %s104, 1
      %s107 = sadd.s32 %s37, 1
      %p108 = scmp.lt.s32.totalorder %s107, 1
      %s109 = scalar_select %p108, %s107, 1
      %s110 = ssub.s32 %s29, %s41
      %s111 = ssub.s32 %s106, %s109
      %s112 = sor.u32 %s110, %s111
      %p113 = scmp.eq.s32.totalorder %s112, 0
      %s115 = sadd.s32 %s114, 1
      %s116 = scalar_select %p113, %s114, %s115
      %p119 = pneg %p113
      %p120 = scmp.eq.s32.totalorder %s22, 3
      %p121 = por %p119, %p120
      %p122 = scmp.ne.s32.totalorder %s114, %s117
      %p123 = scmp.eq.s32.totalorder %s22, 0
      %p124 = por %p122, %p123
      %p125 = scmp.ne.s32.totalorder %s114, %s117
      %p126 = scmp.eq.s32.totalorder %s27, 3
      %p127 = por %p125, %p126
      %p128 = scmp.ne.s32.totalorder %s117, %s118
      %p129 = scmp.eq.s32.totalorder %s27, 0
      %p130 = por %p128, %p129
      %p131 = scmp.ne.s32.totalorder %s117, %s118
      %p132 = scmp.eq.s32.totalorder %s28, 3
      %p133 = por %p131, %p132
      %p135 = scmp.ne.s32.totalorder %s118, %s134
      %p136 = scmp.eq.s32.totalorder %s28, 0
      %p137 = por %p135, %p136
      %s139 = sadd.s32 %s138, 1
      %p142 = scmp.eq.s32.totalorder %s22, 3
      %p143 = scmp.ne.s32.totalorder %s138, %s140
      %p144 = scmp.eq.s32.totalorder %s22, 0
      %p145 = por %p143, %p144
      %p146 = scmp.ne.s32.totalorder %s138, %s140
      %p147 = scmp.eq.s32.totalorder %s27, 3
      %p148 = por %p146, %p147
      %p149 = scmp.ne.s32.totalorder %s140, %s141
      %p150 = scmp.eq.s32.totalorder %s27, 0
      %p151 = por %p149, %p150
      %p152 = scmp.ne.s32.totalorder %s140, %s141
      %p153 = scmp.eq.s32.totalorder %s28, 3
      %p154 = por %p152, %p153
      %p156 = scmp.ne.s32.totalorder %s141, %s155
      %p157 = scmp.eq.s32.totalorder %s28, 0
      %p158 = por %p156, %p157
      %s160 = sadd.s32 %s159, 1
      %p163 = scmp.eq.s32.totalorder %s22, 3
      %p164 = scmp.ne.s32.totalorder %s159, %s161
      %p165 = scmp.eq.s32.totalorder %s22, 0
      %p166 = por %p164, %p165
      %p167 = scmp.ne.s32.totalorder %s159, %s161
      %p168 = scmp.eq.s32.totalorder %s27, 3
      %p169 = por %p167, %p168
      %p170 = scmp.ne.s32.totalorder %s161, %s162
      %p171 = scmp.eq.s32.totalorder %s27, 0
      %p172 = por %p170, %p171
      %p173 = scmp.ne.s32.totalorder %s161, %s162
      %p174 = scmp.eq.s32.totalorder %s28, 3
      %p175 = por %p173, %p174
      %p177 = scmp.ne.s32.totalorder %s162, %s176
      %p178 = scmp.eq.s32.totalorder %s28, 0
      %p179 = por %p177, %p178
      %s180 = ssub.s32 %s29, %s41
      %s181 = ssub.s32 %s30, %s37
      %s182 = sor.u32 %s180, %s181
      %p183 = scmp.eq.s32.totalorder %s182, 0
      %s185 = sadd.s32 %s184, 1
      %s186 = scalar_select %p183, %s184, %s185
      %p189 = pneg %p183
      %p190 = scmp.eq.s32.totalorder %s22, 3
      %p191 = por %p189, %p190
      %p192 = scmp.ne.s32.totalorder %s184, %s187
      %p193 = scmp.eq.s32.totalorder %s22, 0
      %p194 = por %p192, %p193
      %p195 = scmp.ne.s32.totalorder %s184, %s187
      %p196 = scmp.eq.s32.totalorder %s27, 3
      %p197 = por %p195, %p196
      %p198 = scmp.ne.s32.totalorder %s187, %s188
      %p199 = scmp.eq.s32.totalorder %s27, 0
      %p200 = por %p198, %p199
      %p201 = scmp.ne.s32.totalorder %s187, %s188
      %p202 = scmp.eq.s32.totalorder %s28, 3
      %p203 = por %p201, %p202
      %p205 = scmp.ne.s32.totalorder %s188, %s204
      %p206 = scmp.eq.s32.totalorder %s28, 0
      %p207 = por %p205, %p206
      %s208 = ssub.s32 %s29, %s41
      %p209 = scmp.eq.s32.totalorder %s208, 0
      %s211 = sadd.s32 %s210, 1
      %s212 = scalar_select %p209, %s210, %s211
      %p215 = pneg %p209
      %p216 = scmp.eq.s32.totalorder %s22, 3
      %p217 = por %p215, %p216
      %p218 = scmp.ne.s32.totalorder %s210, %s213
      %p219 = scmp.eq.s32.totalorder %s22, 0
      %p220 = por %p218, %p219
      %p221 = scmp.ne.s32.totalorder %s210, %s213
      %p222 = scmp.eq.s32.totalorder %s27, 3
      %p223 = por %p221, %p222
      %p224 = scmp.ne.s32.totalorder %s213, %s214
      %p225 = scmp.eq.s32.totalorder %s27, 0
      %p226 = por %p224, %p225
      %p227 = scmp.ne.s32.totalorder %s213, %s214
      %p228 = scmp.eq.s32.totalorder %s28, 3
      %p229 = por %p227, %p228
      %p231 = scmp.ne.s32.totalorder %s214, %s230
      %p232 = scmp.eq.s32.totalorder %s28, 0
      %p233 = por %p231, %p232
      %p234 = scmp.le.s32.totalorder 1, %s22
      %p235 = scmp.lt.s32.totalorder %s22, 5
      %p236 = pnand %p234, %p235
      %p237 = pneg %p236
      // Predicated region
      $region9: #{tpu_custom_call.1} parent=5 // pred_check
        _
      $region10: #{tpu_custom_call.1} parent=5 // pred_check_branch
        %239 = sbr.rel (%p236) target = $region12
      $region11: #{tpu_custom_call.1} parent=5 // pred_region
        %s240 = ssub.s32 %s22, 1
        // Predicated region
        $region13: #{tpu_custom_call.1} parent=11 // pred_check
          %p241 = pneg %p151
        $region14: #{tpu_custom_call.1} parent=11 // pred_check_branch
          %243 = sbr.rel (%p241) target = $region16
        $region15: #{tpu_custom_call.1} parent=11 // pred_region
          _
        $region16: #{tpu_custom_call.1} parent=11 // pred_fallthru
          _
        // Predicated region
        $region17: #{tpu_custom_call.1} parent=11 // pred_check
          %p244 = pneg %p172
        $region18: #{tpu_custom_call.1} parent=11 // pred_check_branch
          %246 = sbr.rel (%p244) target = $region20
        $region19: #{tpu_custom_call.1} parent=11 // pred_region
          _
        $region20: #{tpu_custom_call.1} parent=11 // pred_fallthru
          _
      $region12: #{tpu_custom_call.1} parent=5 // pred_fallthru
        _
      %p247 = scmp.lt.s32.totalorder %s22, 4
      // Predicated region
      $region21: #{tpu_custom_call.1} parent=5 // pred_check
        %p248 = pneg %p247
      $region22: #{tpu_custom_call.1} parent=5 // pred_check_branch
        %250 = sbr.rel (%p248) target = $region24
      $region23: #{tpu_custom_call.1} parent=5 // pred_region
        // Predicated region
        $region25: #{tpu_custom_call.1} parent=23 // pred_check
          %p251 = pneg %p56
        $region26: #{tpu_custom_call.1} parent=23 // pred_check_branch
          %253 = sbr.rel (%p251) target = $region28
        $region27: #{tpu_custom_call.1} parent=23 // pred_region
          %s254 = sand.u32 %s46, 1
          %s255 = scalar_lea.sflag [#allocation3], %s254
          %s256 = sand.u32 %s46, 1
          %s257 = smul.addr %s256, 16
          %s258 = scalar_lea.vmem [#allocation2], %s257
          %s260 = ssub.s32 256, 256
          %261 = vsyncadd %s255, %s260
          %s262 = smul.addr %s29, 4
          %s263 = sadd.s32 %s30, %s262
          %s264 = smul.addr %s263, 128
          %s265 = scalar_lea.hbm %s0, %s264
          %s266 = sshll.u32 %s258, 4
          %s267 = int_to_ptr.vmem [resolvable:$true] %s266
          %272 = dma.hbm_to_vmem [thread:$0]  %s265, 256, %s267, %s255, 256, 128, 8
        $region28: #{tpu_custom_call.1} parent=23 // pred_fallthru
          _
        // Predicated region
        $region29: #{tpu_custom_call.1} parent=23 // pred_check
          %p273 = pneg %p90
        $region30: #{tpu_custom_call.1} parent=23 // pred_check_branch
          %275 = sbr.rel (%p273) target = $region32
        $region31: #{tpu_custom_call.1} parent=23 // pred_region
          %s276 = sand.u32 %s22, 1
          %s277 = scalar_lea.sflag [#allocation6], %s276
          %s278 = sand.u32 %s80, 1
          %s279 = smul.addr %s278, 16
          %s280 = scalar_lea.vmem [#allocation5], %s279
          %s281 = ssub.s32 %s30, 1
          %p282 = scmp.gt.s32.totalorder %s281, 0
          %s283 = scalar_select %p282, %s281, 0
          %s285 = ssub.s32 256, 256
          %286 = vsyncadd %s277, %s285
          %s287 = smul.addr %s29, 4
          %s288 = sadd.s32 %s283, %s287
          %s289 = smul.addr %s288, 128
          %s290 = scalar_lea.hbm %s1, %s289
          %s291 = sshll.u32 %s280, 4
          %s292 = int_to_ptr.vmem [resolvable:$true] %s291
          %297 = dma.hbm_to_vmem [thread:$0]  %s290, 256, %s292, %s277, 256, 128, 8
        $region32: #{tpu_custom_call.1} parent=23 // pred_fallthru
          _
        // Predicated region
        $region33: #{tpu_custom_call.1} parent=23 // pred_check
          %p298 = pneg %p124
        $region34: #{tpu_custom_call.1} parent=23 // pred_check_branch
          %300 = sbr.rel (%p298) target = $region36
        $region35: #{tpu_custom_call.1} parent=23 // pred_region
          %s301 = sand.u32 %s22, 1
          %s302 = scalar_lea.sflag [#allocation6], %s301
          %s303 = sand.u32 %s114, 1
          %s304 = smul.addr %s303, 16
          %s305 = scalar_lea.vmem [#allocation7], %s304
          %s306 = sadd.s32 %s30, 1
          %p307 = scmp.lt.s32.totalorder %s306, 1
          %s308 = scalar_select %p307, %s306, 1
          %s310 = ssub.s32 256, 256
          %311 = vsyncadd %s302, %s310
          %s312 = smul.addr %s29, 4
          %s313 = sadd.s32 %s308, %s312
          %s314 = smul.addr %s313, 128
          %s315 = scalar_lea.hbm %s2, %s314
          %s316 = sshll.u32 %s305, 4
          %s317 = int_to_ptr.vmem [resolvable:$true] %s316
          %322 = dma.hbm_to_vmem [thread:$0]  %s315, 256, %s317, %s302, 256, 128, 8
        $region36: #{tpu_custom_call.1} parent=23 // pred_fallthru
          _
      $region24: #{tpu_custom_call.1} parent=5 // pred_fallthru
        _
      %p323 = scmp.le.s32.totalorder 1, %s22
      %p324 = scmp.lt.s32.totalorder %s22, 5
      %p325 = pnand %p323, %p324
      %p326 = pneg %p325
      // Predicated region
      $region37: #{tpu_custom_call.1} parent=5 // pred_check
        _
      $region38: #{tpu_custom_call.1} parent=5 // pred_check_branch
        %328 = sbr.rel (%p325) target = $region40
      $region39: #{tpu_custom_call.1} parent=5 // pred_region
        %s329 = ssub.s32 %s22, 1
        %s330 = sand.u32 %s49, 1
        %s331 = scalar_lea.sflag [#allocation3], %s330
        %s332 = sand.u32 %s49, 1
        %s333 = smul.addr %s332, 16
        %s334 = scalar_lea.vmem [#allocation2], %s333
        // Predicated region
        $region41: #{tpu_custom_call.1} parent=39 // pred_check
          %p335 = pneg %p62
        $region42: #{tpu_custom_call.1} parent=39 // pred_check_branch
          %337 = sbr.rel (%p335) target = $region44
        $region43: #{tpu_custom_call.1} parent=39 // pred_region
          %338 = dma.done %s331, 256
        $region44: #{tpu_custom_call.1} parent=39 // pred_fallthru
          _
        %s339 = sand.u32 %s27, 1
        %s340 = scalar_lea.sflag [#allocation6], %s339
        %s341 = sand.u32 %s83, 1
        %s342 = smul.addr %s341, 16
        %s343 = scalar_lea.vmem [#allocation5], %s342
        // Predicated region
        $region45: #{tpu_custom_call.1} parent=39 // pred_check
          %p344 = pneg %p96
        $region46: #{tpu_custom_call.1} parent=39 // pred_check_branch
          %346 = sbr.rel (%p344) target = $region48
        $region47: #{tpu_custom_call.1} parent=39 // pred_region
          %347 = dma.done %s340, 256
        $region48: #{tpu_custom_call.1} parent=39 // pred_fallthru
          _
        %s348 = sand.u32 %s27, 1
        %s349 = scalar_lea.sflag [#allocation6], %s348
        %s350 = sand.u32 %s117, 1
        %s351 = smul.addr %s350, 16
        %s352 = scalar_lea.vmem [#allocation7], %s351
        // Predicated region
        $region49: #{tpu_custom_call.1} parent=39 // pred_check
          %p353 = pneg %p130
        $region50: #{tpu_custom_call.1} parent=39 // pred_check_branch
          %355 = sbr.rel (%p353) target = $region52
        $region51: #{tpu_custom_call.1} parent=39 // pred_region
          %356 = dma.done %s349, 256
        $region52: #{tpu_custom_call.1} parent=39 // pred_fallthru
          _
        %s357 = sand.u32 %s49, 1
        %s358 = scalar_lea.sflag [#allocation3], %s357
        %s359 = sand.u32 %s49, 1
        %s360 = smul.addr %s359, 16
        %s361 = scalar_lea.vmem [#allocation2], %s360
        %p362 = pneg %p62
        %p363 = pneg %p59
        %s364 = sand.u32 %s27, 1
        %s365 = scalar_lea.sflag [#allocation6], %s364
        %s366 = sand.u32 %s83, 1
        %s367 = smul.addr %s366, 16
        %s368 = scalar_lea.vmem [#allocation5], %s367
        %p369 = pneg %p96
        %p370 = pneg %p93
        %s371 = sand.u32 %s27, 1
        %s372 = scalar_lea.sflag [#allocation6], %s371
        %s373 = sand.u32 %s117, 1
        %s374 = smul.addr %s373, 16
        %s375 = scalar_lea.vmem [#allocation7], %s374
        %p376 = pneg %p130
        %p377 = pneg %p127
        %p378 = pneg %p151
        %p379 = pneg %p148
        %p380 = pneg %p172
        %p381 = pneg %p169
        %p382 = pneg %p200
        %p383 = pneg %p197
        %s384 = sand.u32 %s187, 1
        %s385 = scalar_lea.sflag [#allocation4], %s384
        %s386 = sand.u32 %s187, 1
        %s387 = smul.addr %s386, 16
        %s388 = scalar_lea.vmem [#allocation8], %s387
        %p389 = pneg %p226
        %p390 = pneg %p223
        %p391 = scmp.lt.s32.totalorder %s31, 1
        %s392 = scalar_select %p391, %s31, 1
        %s393 = smul.addr %s392, 2
        %s394 = smul.addr %s393, 8
        %s395 = scalar_lea.vmem %s6, %s394
        %s396 = ssub.s32 %s32, 1
        %p397 = scmp.gt.s32.totalorder %s396, 0
        %s398 = scalar_select %p397, %s396, 0
        %s399 = sadd.s32 %s32, 1
        %p400 = scmp.lt.s32.totalorder %s399, 1
        %s401 = scalar_select %p400, %s399, 1
        %p402 = scmp.lt.s32.totalorder %s31, 1
        %s403 = scalar_select %p402, %s31, 1
        %s404 = smul.addr %s403, 2
        %s405 = smul.addr %s404, 8
        %s406 = scalar_lea.vmem %s6, %s405
        %v408 = vld [vmem:[%s334] sm:$0xff]
        %s409 = scalar_lea.vmem %s334, 8 [#allocation2]
        %v410 = vld [vmem:[%s409] sm:$0xff]
        %v411 = vmax.f32 %v408, %v410
        %v412 = vld [vmem:[%s343] sm:$0xff]
        %s413 = scalar_lea.vmem %s343, 8 [#allocation5]
        %v414 = vld [vmem:[%s413] sm:$0xff]
        %v415 = vmax.f32 %v412, %v414
        %v416 = vld [vmem:[%s352] sm:$0xff]
        %s417 = scalar_lea.vmem %s352, 8 [#allocation7]
        %v418 = vld [vmem:[%s417] sm:$0xff]
        %v419 = vmax.f32 %v416, %v418
        %p420 = scmp.gt.s32.totalorder %s32, 0
        %s421 = scalar_select %p420, 1, 0
        %v422 = vstv %s421
        %vm423 = vcmp.eq.s32.totalorder %v422, 1
        %v424 = vsel %vm423, %v415, 0.0
        %p425 = scmp.lt.s32.totalorder %s32, 1
        %s426 = scalar_select %p425, 1, 0
        %v427 = vstv %s426
        %vm428 = vcmp.eq.s32.totalorder %v427, 1
        %v429 = vsel %vm428, %v419, 0.0
        %v430 = vld [vmem:[%s3] sm:$0xf]
        %v431 = vld [vmem:[%s3 + $0x4] sm:$0xf]
        %v432 = vlaneseq
        %v433 = vand.u32 %v432, 127
        %vm434 = vcmp.eq.s32.totalorder %v433, 0
        %435 = vrot.lane.b32.xlu0 %v411, 1
        %v436 = vpop.permute.xlu0 %435
        %v437 = vsel %vm434, 1, 0
        %vm438 = vcmp.eq.s32.totalorder %v437, 1
        %440 = vset.pattern.permute.xlu0 127
        %441 = vperm.xlu0 %440, %v424
        %v442 = vpop.permute.xlu0 %441
        %v444 = vsel %vm438, %v442, %v436
        %vm445 = vcmp.eq.s32.totalorder %v433, 127
        %446 = vrot.lane.b32.xlu0 %v411, 127
        %v447 = vpop.permute.xlu0 %446
        %v448 = vsel %vm445, 1, 0
        %vm449 = vcmp.eq.s32.totalorder %v448, 1
        %451 = vset.pattern.permute.xlu0 0
        %452 = vperm.xlu0 %451, %v429
        %v453 = vpop.permute.xlu0 %452
        %v455 = vsel %vm449, %v453, %v447
        %v456 = vpack.c.bf16 %v444, %v444
        %v457 = vpack.c.bf16 %v411, %v411
        %v458 = vpack.c.bf16 %v455, %v455
        %v460 = vrot.slane %v457, 4
        %vm461 = vcmask 1043456
        %v464 = vsel %vm461, %v456, %v460
        %v466 = vld [vmem:[%s4] sm:$0xff]
        %v467 = vld [vmem:[%s4 + $0x8] sm:$0xff]
        %469 = vset.pattern.permute.xlu0 0
        %470 = vperm.xlu0 %469, %v466
        %v471 = vpop.permute.xlu0 %470
        %474 = vset.pattern.permute.xlu0 0
        %475 = vperm.xlu0 %474, %v467
        %v476 = vpop.permute.xlu0 %475
        %v480 = vunpack.c.l.b16 %v430
        %v481 = vunpack.c.l.b16 %v431
        %v482 = vpack.c.b16 %v481, %v480
        %vm483 = vcmask 195584
        %v485 = vsel %vm483, %v482, 0
        %v488 = vsel %vm461, %v458, 0
        %490 = vmatprep.subr.bf16.mxu0 0
        %491 = vmatpush1.bf16.msra.mxu0 %v464
        %492 = vmatprep.subr.bf16.mxu0 0
        %493 = vmatpush1.bf16.msra.mxu0 %v488
        %494 = vmatprep.subr.bf16.mxu0 0
        %495 = vmatpush1.bf16.msra.mxu0 0
        %496 = vmatprep.subr.bf16.mxu0 0
        %497 = vmatpush1.bf16.msra.mxu0 0
        %498 = vmatprep.subr.bf16.mxu0 0
        %499 = vmatpush1.bf16.msra.mxu0 0
        %500 = vmatprep.subr.bf16.mxu0 0
        %501 = vmatpush1.bf16.msra.mxu0 0
        %502 = vmatprep.subr.bf16.mxu0 0
        %503 = vmatpush1.bf16.msra.mxu0 0
        %504 = vmatprep.subr.bf16.mxu0 0
        %505 = vmatpush1.bf16.msra.mxu0 0
        %506 = vmatprep.subr.bf16.mxu0 0
        %507 = vmatpush1.bf16.msra.mxu0 0
        %508 = vmatprep.subr.bf16.mxu0 0
        %509 = vmatpush1.bf16.msra.mxu0 0
        %510 = vmatprep.subr.bf16.mxu0 0
        %511 = vmatpush1.bf16.msra.mxu0 0
        %512 = vmatprep.subr.bf16.mxu0 0
        %513 = vmatpush1.bf16.msra.mxu0 0
        %514 = vmatprep.subr.bf16.mxu0 0
        %515 = vmatpush1.bf16.msra.mxu0 0
        %516 = vmatprep.subr.bf16.mxu0 0
        %517 = vmatpush1.bf16.msra.mxu0 0
        %518 = vmatprep.subr.bf16.mxu0 0
        %519 = vmatpush1.bf16.msra.mxu0 0
        %520 = vmatprep.subr.bf16.mxu0 0
        %521 = vmatpush1.bf16.msra.mxu0 0
        %522 = vmatprep.mubr.bf16.mxu0 0
        %523 = vmatmul.mubr.bf16.gmra.mrb[0].mxu0 %v485
        %v524 = vpop.f32.mrb[0].mxu0
        %v525 = vadd.f32 %v471, %v524
        %v526 = vpop.f32.mrb[0].mxu0
        %v527 = vpop.f32.mrb[0].mxu0
        %v528 = vadd.f32 %v476, %v527
        %v529 = vpop.f32.mrb[0].mxu0
        %530 = vdwg.mxu0
        %531 = vst [vmem:[%s388] sm:$0xff] %v525
        %532 = vst [vmem:[%s388 + $0x8] sm:$0xff] %v528
        %533 = vadd.xlane.f32.xlu0 %v525
        %v534 = vpop.xlane.xlu0 %533
        %535 = vadd.xlane.f32.xlu0 %v528
        %v536 = vpop.xlane.xlu0 %535
        %v537 = vmul.f32 %v525, %v525
        %v538 = vmul.f32 %v528, %v528
        %539 = vadd.xlane.f32.xlu0 %v537
        %v540 = vpop.xlane.xlu0 %539
        %541 = vadd.xlane.f32.xlu0 %v538
        %v542 = vpop.xlane.xlu0 %541
        %vm543 = vcmask 7168
        %v544 = vsel %vm543, %v534, %v540
        %v545 = vsel %vm543, %v536, %v542
        %p546 = scmp.eq.s32.totalorder %s32, 0
        // Predicated region
        $region53: #{tpu_custom_call.1} parent=39 // pred_check
          %p547 = pneg %p546
        $region54: #{tpu_custom_call.1} parent=39 // pred_check_branch
          %549 = sbr.rel (%p547) target = $region56
        $region55: #{tpu_custom_call.1} parent=39 // pred_region
          %vm550 = vcmask 15360
          %551 = vst.msk [vmem:[%s406] sm:$0xff] %vm550, 0.0
          %552 = vst.msk [vmem:[%s406 + $0x8] sm:$0xff] %vm550, 0.0
        $region56: #{tpu_custom_call.1} parent=39 // pred_fallthru
          _
        %v553 = vld [vmem:[%s406] sm:$0xff]
        %v554 = vld [vmem:[%s406 + $0x8] sm:$0xff]
        %v555 = vadd.f32 %v553, %v544
        %v556 = vadd.f32 %v554, %v545
        %vm557 = vcmask 15360
        %558 = vst.msk [vmem:[%s406] sm:$0xff] %vm557, %v555
        %559 = vst.msk [vmem:[%s406 + $0x8] sm:$0xff] %vm557, %v556
        %s560 = sand.u32 %s187, 1
        %s561 = scalar_lea.sflag [#allocation4], %s560
        %s562 = sand.u32 %s187, 1
        %s563 = smul.addr %s562, 16
        %s564 = scalar_lea.vmem [#allocation8], %s563
        %p565 = scmp.lt.s32.totalorder %s31, 1
        %s566 = scalar_select %p565, %s31, 1
        %s567 = smul.addr %s566, 2
        %s568 = smul.addr %s567, 8
        %s569 = scalar_lea.vmem %s6, %s568
        // Predicated region
        $region57: #{tpu_custom_call.1} parent=39 // pred_check
          %p570 = pneg %p197
        $region58: #{tpu_custom_call.1} parent=39 // pred_check_branch
          %572 = sbr.rel (%p570) target = $region60
        $region59: #{tpu_custom_call.1} parent=39 // pred_region
          %s574 = ssub.s32 256, 256
          %575 = vsyncadd %s561, %s574
          %s576 = smul.addr %s31, 4
          %s577 = sadd.s32 %s32, %s576
          %s578 = smul.addr %s577, 128
          %s579 = scalar_lea.hbm %s5, %s578
          %s580 = sshll.u32 %s564, 4
          %s581 = int_to_ptr.vmem [resolvable:$true] %s580
          %586 = dma.vmem_to_hbm [thread:$0]  %s581, 256, %s579, %s561, 128, 256, 8
        $region60: #{tpu_custom_call.1} parent=39 // pred_fallthru
          _
        // Predicated region
        $region61: #{tpu_custom_call.1} parent=39 // pred_check
          %p587 = pneg %p223
        $region62: #{tpu_custom_call.1} parent=39 // pred_check_branch
          %589 = sbr.rel (%p587) target = $region64
        $region63: #{tpu_custom_call.1} parent=39 // pred_region
          _
        $region64: #{tpu_custom_call.1} parent=39 // pred_fallthru
          _
      $region40: #{tpu_custom_call.1} parent=5 // pred_fallthru
        _
      %p590 = scmp.le.s32.totalorder 2, %s22
      // Predicated region
      $region65: #{tpu_custom_call.1} parent=5 // pred_check
        %p591 = pneg %p590
      $region66: #{tpu_custom_call.1} parent=5 // pred_check_branch
        %593 = sbr.rel (%p591) target = $region68
      $region67: #{tpu_custom_call.1} parent=5 // pred_region
        %s594 = ssub.s32 %s22, 2
        // Predicated region
        $region69: #{tpu_custom_call.1} parent=67 // pred_check
          %p595 = pneg %p203
        $region70: #{tpu_custom_call.1} parent=67 // pred_check_branch
          %597 = sbr.rel (%p595) target = $region72
        $region71: #{tpu_custom_call.1} parent=67 // pred_region
          %s598 = sand.u32 %s188, 1
          %s599 = scalar_lea.sflag [#allocation4], %s598
          %s600 = sand.u32 %s188, 1
          %s601 = smul.addr %s600, 16
          %s602 = scalar_lea.vmem [#allocation8], %s601
          %603 = dma.done %s599, 256
        $region72: #{tpu_custom_call.1} parent=67 // pred_fallthru
          _
        // Predicated region
        $region73: #{tpu_custom_call.1} parent=67 // pred_check
          %p604 = pneg %p229
        $region74: #{tpu_custom_call.1} parent=67 // pred_check_branch
          %606 = sbr.rel (%p604) target = $region76
        $region75: #{tpu_custom_call.1} parent=67 // pred_region
          %p607 = scmp.lt.s32.totalorder %s33, 1
          %s608 = scalar_select %p607, %s33, 1
          %s609 = smul.addr %s608, 2
          %s610 = smul.addr %s609, 8
          %s611 = scalar_lea.vmem %s6, %s610
        $region76: #{tpu_custom_call.1} parent=67 // pred_fallthru
          _
      $region68: #{tpu_custom_call.1} parent=5 // pred_fallthru
        _
    $region6: #{tpu_custom_call.1} parent=1 // loop_footer
      %s26 = sadd.s32 1, %s22
    $region7: #{tpu_custom_call.1} parent=1 // loop_footer_branch
      %21 = sbr.rel target = $region3
    $region8: #{tpu_custom_call.1} parent=1 // loop_exit
      _
    %612 = vsyncpa [#allocation3], 1
    %s613 = scalar_lea.sflag [#allocation3], 1
    %614 = vsyncpa %s613, 1
    %615 = vsyncpa [#allocation6], 1
    %s616 = scalar_lea.sflag [#allocation6], 1
    %617 = vsyncpa %s616, 1
    %618 = vsyncpa [#allocation4], 1
    %s619 = scalar_lea.sflag [#allocation4], 1
    %620 = vsyncpa %s619, 1

</llo_original>
